<compile_context>
chip_gen: v5e
topology: v5e:2x2
jax: 0.10.0
libtpu: 0.0.40
codegen_flags: <defaults>
</compile_context>

<pallas_src>
import jax
import jax.numpy as jnp
from jax import lax
from jax.experimental import pallas as pl
from jax.experimental.pallas import tpu as pltpu


def _gram_kernel(p_ref, s_ref, gp_ref, gs_ref):
    # gp_ref / gs_ref are (B, B) f32 output blocks that stay resident across
    # the reduction axis (their index_map is constant in k).
    @pl.when(pl.program_id(1) == 0)
    def _init():
        gp_ref[...] = jnp.zeros_like(gp_ref)
        gs_ref[...] = jnp.zeros_like(gs_ref)

    dn = (((1,), (1,)), ((), ()))   # contract the feature axis of both operands
    p = p_ref[...]
    s = s_ref[...]
    gp_ref[...] += lax.dot_general(p, p, dimension_numbers=dn,
                                   preferred_element_type=jnp.float32)
    gs_ref[...] += lax.dot_general(s, s, dimension_numbers=dn,
                                   preferred_element_type=jnp.float32)


def diff_loss(private_samples, shared_samples, *, tk_max=2048, num_cores=2):
    """Pallas implementation of DiffLoss.forward. Returns a scalar float32."""
    b = private_samples.shape[0]
    p2 = private_samples.reshape(b, -1)
    s2 = shared_samples.reshape(b, -1)
    d = p2.shape[1]
    assert s2.shape[1] == d, "private/shared must flatten to the same size"

    # Feature-axis tiling: lane-aligned (multiple of 128), large tiles to
    # amortize per-grid-step overhead, capped so every core gets >= 1 tile.
    per_core = pl.cdiv(d, num_cores)
    tk = max(128, min(tk_max, pl.cdiv(per_core, 128) * 128))
    nk = pl.cdiv(per_core, tk)            # K tiles per core
    d_pad = num_cores * nk * tk
    if d_pad != d:                        # zero-pad feature axis: zeros are inert
        p2 = jnp.pad(p2, ((0, 0), (0, d_pad - d)))
        s2 = jnp.pad(s2, ((0, 0), (0, d_pad - d)))

    in_map = lambda c, k: (0, c * nk + k)
    cost_est = pl.CostEstimate(
        flops=4 * b * b * d_pad,
        transcendentals=0,
        bytes_accessed=2 * b * d_pad * p2.dtype.itemsize,
    )

    gp_parts, gs_parts = pl.pallas_call(
        _gram_kernel,
        out_shape=(
            jax.ShapeDtypeStruct((num_cores, b, b), jnp.float32),
            jax.ShapeDtypeStruct((num_cores, b, b), jnp.float32),
        ),
        grid=(num_cores, nk),
        in_specs=[
            pl.BlockSpec((b, tk), in_map),
            pl.BlockSpec((b, tk), in_map),
        ],
        out_specs=(
            pl.BlockSpec((None, b, b), lambda c, k: (c, 0, 0)),
            pl.BlockSpec((None, b, b), lambda c, k: (c, 0, 0)),
        ),
        compiler_params=pltpu.CompilerParams(
            dimension_semantics=("parallel", "arbitrary"),
        ),
        cost_estimate=cost_est,
    )(p2, s2)

    # Tiny (B, B) epilogue in plain JAX: combine per-core partial Grams, then
    # fold in batch-centering + row L2 normalization + mean + relu.
    gp = jnp.sum(gp_parts, axis=0)
    gs = jnp.sum(gs_parts, axis=0)

    def center(g):                         # Gram of batch-centered rows
        r = jnp.sum(g, axis=1, keepdims=True)
        return g - (r + r.T) / b + jnp.sum(g) / (b * b)

    gpc = center(gp)
    gsc = center(gs)
    eps = jnp.float32(1e-12)               # matches torch F.normalize(eps=1e-12)
    pn = jnp.maximum(jnp.sqrt(jnp.maximum(jnp.diagonal(gpc), 0.0)), eps)
    sn = jnp.maximum(jnp.sqrt(jnp.maximum(jnp.diagonal(gsc), 0.0)), eps)
    gpn = gpc / (pn[:, None] * pn[None, :])
    gsn = gsc / (sn[:, None] * sn[None, :])
    cost = jnp.sum(gpn * gsn) / (jnp.float32(d) * jnp.float32(d))
    return jnp.where(cost > 0.0, cost, 0.0)


def _diff_loss_ref(private_samples, shared_samples):
    """Pure-JAX reference mirroring the PyTorch code line by line."""
    b = private_samples.shape[0]
    p = private_samples.reshape(b, -1).astype(jnp.float32)
    s = shared_samples.reshape(b, -1).astype(jnp.float32)
    p = p - jnp.mean(p, axis=0, keepdims=True)
    s = s - jnp.mean(s, axis=0, keepdims=True)
    p = p / jnp.maximum(jnp.linalg.norm(p, axis=1, keepdims=True), 1e-12)
    s = s / jnp.maximum(jnp.linalg.norm(s, axis=1, keepdims=True), 1e-12)
    corr = p.T @ s
    cost = jnp.mean(corr ** 2)
    return jnp.where(cost > 0, cost, 0.0)


if __name__ == "__main__":
    key = jax.random.PRNGKey(0)
    k1, k2 = jax.random.split(key)
    # Small NCHW-shaped activations, as a DSN encoder would emit.
    private = jax.random.normal(k1, (2, 4, 16, 16), dtype=jnp.float32)
    shared = jax.random.normal(k2, (2, 4, 16, 16), dtype=jnp.float32)

    cost = jax.block_until_ready(diff_loss(private, shared))
    ref = jax.block_until_ready(_diff_loss_ref(private, shared))

    assert jnp.isfinite(cost)
    assert abs(float(cost) - float(ref)) <= 1e-5 + 1e-4 * abs(float(ref)), (
        float(cost), float(ref))
    print("KERNEL_OK")
</pallas_src>

<mosaic_0001>
module attributes {stable_mosaic.version = 11 : i64} {
  func.func @_gram_kernel(%arg0: i32, %arg1: i32, %arg2: memref<2x512xf32, #tpu.memory_space<vmem>>, %arg3: memref<2x512xf32, #tpu.memory_space<vmem>>, %arg4: memref<1x2x2xf32, #tpu.memory_space<vmem>>, %arg5: memref<1x2x2xf32, #tpu.memory_space<vmem>>) attributes {dimension_semantics = [#tpu.dimension_semantics<parallel>, #tpu.dimension_semantics<arbitrary>], iteration_bounds = array<i64: 2, 1>, scalar_prefetch = 0 : i64, scratch_operands = 0 : i64, tpu.core_type = #tpu.core_type<tc>, window_params = [{transform_indices = @transform_0, window_bounds = array<i64: 2, 512>}, {transform_indices = @transform_1, window_bounds = array<i64: 2, 512>}, {transform_indices = @transform_2, window_bounds = array<i64: 1, 2, 2>}, {transform_indices = @transform_3, window_bounds = array<i64: 1, 2, 2>}]} {
    %c0_i32 = arith.constant 0 : i32
    %0 = arith.cmpi eq, %arg1, %c0_i32 : i32
    %1 = arith.extui %0 : i1 to i32
    %c0_i32_0 = arith.constant 0 : i32
    %2 = arith.cmpi ne, %1, %c0_i32_0 : i32
    scf.if %2 {
      %cst_17 = arith.constant 0.000000e+00 : f32
      %19 = vector.broadcast %cst_17 : f32 to vector<2x2xf32>
      %c0_18 = arith.constant 0 : index
      %c0_19 = arith.constant 0 : index
      %c0_20 = arith.constant 0 : index
      %20 = vector.load %arg4[%c0_18, %c0_19, %c0_20] : memref<1x2x2xf32, #tpu.memory_space<vmem>>, vector<1x2x2xf32>
      %21 = vector.shape_cast %20 : vector<1x2x2xf32> to vector<2x2xf32>
      %22 = vector.shape_cast %19 : vector<2x2xf32> to vector<1x2x2xf32>
      tpu.vector_store %arg4[%c0_18, %c0_19, %c0_20], %22 {strides = array<i32>} : memref<1x2x2xf32, #tpu.memory_space<vmem>>, vector<1x2x2xf32>,
      %cst_21 = arith.constant 0.000000e+00 : f32
      %23 = vector.broadcast %cst_21 : f32 to vector<2x2xf32>
      %c0_22 = arith.constant 0 : index
      %c0_23 = arith.constant 0 : index
      %c0_24 = arith.constant 0 : index
      %24 = vector.load %arg5[%c0_22, %c0_23, %c0_24] : memref<1x2x2xf32, #tpu.memory_space<vmem>>, vector<1x2x2xf32>
      %25 = vector.shape_cast %24 : vector<1x2x2xf32> to vector<2x2xf32>
      %26 = vector.shape_cast %23 : vector<2x2xf32> to vector<1x2x2xf32>
      tpu.vector_store %arg5[%c0_22, %c0_23, %c0_24], %26 {strides = array<i32>} : memref<1x2x2xf32, #tpu.memory_space<vmem>>, vector<1x2x2xf32>,
    } else {
    }
    %c0 = arith.constant 0 : index
    %c0_1 = arith.constant 0 : index
    %3 = vector.load %arg2[%c0, %c0_1] : memref<2x512xf32, #tpu.memory_space<vmem>>, vector<2x512xf32>
    %c0_2 = arith.constant 0 : index
    %c0_3 = arith.constant 0 : index
    %4 = vector.load %arg3[%c0_2, %c0_3] : memref<2x512xf32, #tpu.memory_space<vmem>>, vector<2x512xf32>
    %c0_4 = arith.constant 0 : index
    %c0_5 = arith.constant 0 : index
    %c0_6 = arith.constant 0 : index
    %5 = vector.load %arg4[%c0_4, %c0_5, %c0_6] : memref<1x2x2xf32, #tpu.memory_space<vmem>>, vector<1x2x2xf32>
    %6 = vector.shape_cast %5 : vector<1x2x2xf32> to vector<2x2xf32>
    %cst = arith.constant dense<0.000000e+00> : vector<2x2xf32>
    %7 = tpu.matmul %3, %3, %cst {dimension_numbers = #tpu.dot_dimension_numbers<[1], [1], [0], [0], [0, 0, 1, 0], [], []>} : vector<2x512xf32>, vector<2x512xf32>, vector<2x2xf32> -> vector<2x2xf32>
    %8 = arith.addf %6, %7 : vector<2x2xf32>
    %c0_7 = arith.constant 0 : index
    %c0_8 = arith.constant 0 : index
    %c0_9 = arith.constant 0 : index
    %9 = vector.load %arg4[%c0_7, %c0_8, %c0_9] : memref<1x2x2xf32, #tpu.memory_space<vmem>>, vector<1x2x2xf32>
    %10 = vector.shape_cast %9 : vector<1x2x2xf32> to vector<2x2xf32>
    %11 = vector.shape_cast %8 : vector<2x2xf32> to vector<1x2x2xf32>
    tpu.vector_store %arg4[%c0_7, %c0_8, %c0_9], %11 {strides = array<i32>} : memref<1x2x2xf32, #tpu.memory_space<vmem>>, vector<1x2x2xf32>,
    %c0_10 = arith.constant 0 : index
    %c0_11 = arith.constant 0 : index
    %c0_12 = arith.constant 0 : index
    %12 = vector.load %arg5[%c0_10, %c0_11, %c0_12] : memref<1x2x2xf32, #tpu.memory_space<vmem>>, vector<1x2x2xf32>
    %13 = vector.shape_cast %12 : vector<1x2x2xf32> to vector<2x2xf32>
    %cst_13 = arith.constant dense<0.000000e+00> : vector<2x2xf32>
    %14 = tpu.matmul %4, %4, %cst_13 {dimension_numbers = #tpu.dot_dimension_numbers<[1], [1], [0], [0], [0, 0, 1, 0], [], []>} : vector<2x512xf32>, vector<2x512xf32>, vector<2x2xf32> -> vector<2x2xf32>
    %15 = arith.addf %13, %14 : vector<2x2xf32>
    %c0_14 = arith.constant 0 : index
    %c0_15 = arith.constant 0 : index
    %c0_16 = arith.constant 0 : index
    %16 = vector.load %arg5[%c0_14, %c0_15, %c0_16] : memref<1x2x2xf32, #tpu.memory_space<vmem>>, vector<1x2x2xf32>
    %17 = vector.shape_cast %16 : vector<1x2x2xf32> to vector<2x2xf32>
    %18 = vector.shape_cast %15 : vector<2x2xf32> to vector<1x2x2xf32>
    tpu.vector_store %arg5[%c0_14, %c0_15, %c0_16], %18 {strides = array<i32>} : memref<1x2x2xf32, #tpu.memory_space<vmem>>, vector<1x2x2xf32>,
    return
  }
  func.func @transform_0(%arg0: i32, %arg1: i32) -> (i32, i32) {
    %c1_i32 = arith.constant 1 : i32
    %0 = arith.muli %arg0, %c1_i32 : i32
    %1 = arith.addi %0, %arg1 : i32
    %c0_i32 = arith.constant 0 : i32
    %c0_i32_0 = arith.constant 0 : i32
    return %c0_i32, %1 : i32, i32
  }
  func.func @transform_1(%arg0: i32, %arg1: i32) -> (i32, i32) {
    %c1_i32 = arith.constant 1 : i32
    %0 = arith.muli %arg0, %c1_i32 : i32
    %1 = arith.addi %0, %arg1 : i32
    %c0_i32 = arith.constant 0 : i32
    %c0_i32_0 = arith.constant 0 : i32
    return %c0_i32, %1 : i32, i32
  }
  func.func @transform_2(%arg0: i32, %arg1: i32) -> (i32, i32, i32) {
    %c0_i32 = arith.constant 0 : i32
    %c0_i32_0 = arith.constant 0 : i32
    %c0_i32_1 = arith.constant 0 : i32
    return %arg0, %c0_i32, %c0_i32_0 : i32, i32, i32
  }
  func.func @transform_3(%arg0: i32, %arg1: i32) -> (i32, i32, i32) {
    %c0_i32 = arith.constant 0 : i32
    %c0_i32_0 = arith.constant 0 : i32
    %c0_i32_1 = arith.constant 0 : i32
    return %arg0, %c0_i32, %c0_i32_0 : i32, i32, i32
  }
}

</mosaic_0001>

<llo_original>
// kernel: tpu_custom_call.1
$region0: #{tpu_custom_call.1}
  #allocation0 [shape = 'u32[]', space=smem, size = 0x4, offset = 0x4, fixed_abs, tag = 'smem constant byte address 0x4 - core index']
  #allocation1 [shape = 'u32[72,128]{1,0:T(1,128)}', space=vmem, size = 0x9000, scoped, tag = 'internal scratch']
  %s0 = inlined_call_operand.hbm [shape: f32[2,1024], index: 0, kind: input, shape index: {}]
  %s1 = inlined_call_operand.hbm [shape: f32[2,1024], index: 1, kind: input, shape index: {}]
  %s2 = inlined_call_operand.hbm [shape: f32[2,2,2], index: 2, kind: output, shape index: {0}]
  %s3 = inlined_call_operand.hbm [shape: f32[2,2,2], index: 3, kind: output, shape index: {1}]
  %4 = xla_tuple %s2, %s3
  %s5 = sld [smem:[#allocation0]]
  $region61: #{tpu_custom_call.1} parent=0
    _
  %s7 = ssub.s32 1, %s5
  %s8 = scalar_select 0, %s7, %s5
  $region1: #{tpu_custom_call.1} parent=0
    #allocation2 [shape = 'u8[8192]{0}', space=vmem, size = 0x2000, scoped, tag = 'input window, operand 0']
    #allocation3 [shape = 's32[2]{0}', space=sflag, size = 0x8, scoped, tag = 'scoped memory for tpu_custom_call.1']
    #allocation4 [shape = 's32[2]{0}', space=sflag, size = 0x8, scoped, tag = 'scoped memory for tpu_custom_call.1']
    #allocation5 [shape = 'u8[8192]{0}', space=vmem, size = 0x2000, scoped, tag = 'input window, operand 1']
    #allocation6 [shape = 's32[2]{0}', space=sflag, size = 0x8, scoped, tag = 'scoped memory for tpu_custom_call.1']
    #allocation7 [shape = 'u8[2048]{0}', space=vmem, size = 0x800, scoped, tag = 'output window, operand 0']
    #allocation8 [shape = 'u8[2048]{0}', space=vmem, size = 0x800, scoped, tag = 'output window, operand 1']
    #allocation9 [shape = 's32[2]{0}', space=sflag, size = 0x8, scoped, tag = 'scoped memory for tpu_custom_call.1']
    %9 = vsyncpa [#allocation3], 0
    %s10 = scalar_lea.sflag [#allocation3], 1
    %11 = vsyncpa %s10, 0
    %12 = vsyncpa [#allocation6], 0
    %s13 = scalar_lea.sflag [#allocation6], 1
    %14 = vsyncpa %s13, 0
    %15 = vsyncpa [#allocation4], 0
    %s16 = scalar_lea.sflag [#allocation4], 1
    %17 = vsyncpa %s16, 0
    %18 = vsyncpa [#allocation9], 0
    %s19 = scalar_lea.sflag [#allocation9], 1
    %20 = vsyncpa %s19, 0
    loop: start=0, step=1, limit=4
    $region2: #{tpu_custom_call.1} parent=1 // loop_pre_header
      _
    $region3: #{tpu_custom_call.1} parent=1 // loop_header
      %s22 = sphi 0, %s26
      %p23 = scmp.ge.s32.totalorder %s22, 4
      %s29 = sphi 0, %s41
      %s30 = sphi 0, %s37
      %s31 = sphi 0, %s29
      %s32 = sphi 0, %s30
      %s33 = sphi 0, %s31
      %s34 = sphi 0, %s32
      %s46 = sphi 0, %s48
      %s49 = sphi 0, %s46
      %s50 = sphi 0, %s49
      %s66 = sphi 0, %s50
      %s74 = sphi 0, %s76
      %s77 = sphi 0, %s74
      %s78 = sphi 0, %s77
      %s94 = sphi 0, %s78
      %s100 = sphi 0, %s102
      %s103 = sphi 0, %s100
      %s104 = sphi 0, %s103
      %s120 = sphi 0, %s104
      %s126 = sphi 0, %s128
      %s129 = sphi 0, %s126
      %s130 = sphi 0, %s129
      %s146 = sphi 0, %s130
    $region4: #{tpu_custom_call.1} parent=1 // loop_header_branch
      %25 = sbr.rel (%p23) target = $region8
    $region5: #{tpu_custom_call.1} parent=1 // loop_body
      %s27 = ssub.s32 %s22, 1
      %s28 = ssub.s32 %s22, 2
      %s35 = sadd.s32 1, %s30
      %p36 = scmp.ge.s32.totalorder %s35, 1
      %s37 = scalar_select %p36, 0, %s35
      %s38 = sadd.s32 1, %s29
      %s39 = scalar_select %p36, %s38, %s29
      %p40 = scmp.ge.s32.totalorder %s39, 2
      %s41 = scalar_select %p40, 0, %s39
      %s42 = sadd.s32 %s29, %s30
      %s43 = sadd.s32 %s41, %s37
      %s44 = ssub.s32 %s42, %s43
      %p45 = scmp.eq.s32.totalorder %s44, 0
      %s47 = sadd.s32 %s46, 1
      %s48 = scalar_select %p45, %s46, %s47
      %p51 = pneg %p45
      %p52 = scmp.eq.s32.totalorder %s22, 1
      %p53 = por %p51, %p52
      %p54 = scmp.ne.s32.totalorder %s46, %s49
      %p55 = scmp.eq.s32.totalorder %s22, 0
      %p56 = por %p54, %p55
      %p57 = scmp.ne.s32.totalorder %s46, %s49
      %p58 = scmp.eq.s32.totalorder %s27, 1
      %p59 = por %p57, %p58
      %p60 = scmp.ne.s32.totalorder %s49, %s50
      %p61 = scmp.eq.s32.totalorder %s27, 0
      %p62 = por %p60, %p61
      %p63 = scmp.ne.s32.totalorder %s49, %s50
      %p64 = scmp.eq.s32.totalorder %s28, 1
      %p65 = por %p63, %p64
      %p67 = scmp.ne.s32.totalorder %s50, %s66
      %p68 = scmp.eq.s32.totalorder %s28, 0
      %p69 = por %p67, %p68
      %s70 = sadd.s32 %s29, %s30
      %s71 = sadd.s32 %s41, %s37
      %s72 = ssub.s32 %s70, %s71
      %p73 = scmp.eq.s32.totalorder %s72, 0
      %s75 = sadd.s32 %s74, 1
      %s76 = scalar_select %p73, %s74, %s75
      %p79 = pneg %p73
      %p80 = scmp.eq.s32.totalorder %s22, 1
      %p81 = por %p79, %p80
      %p82 = scmp.ne.s32.totalorder %s74, %s77
      %p83 = scmp.eq.s32.totalorder %s22, 0
      %p84 = por %p82, %p83
      %p85 = scmp.ne.s32.totalorder %s74, %s77
      %p86 = scmp.eq.s32.totalorder %s27, 1
      %p87 = por %p85, %p86
      %p88 = scmp.ne.s32.totalorder %s77, %s78
      %p89 = scmp.eq.s32.totalorder %s27, 0
      %p90 = por %p88, %p89
      %p91 = scmp.ne.s32.totalorder %s77, %s78
      %p92 = scmp.eq.s32.totalorder %s28, 1
      %p93 = por %p91, %p92
      %p95 = scmp.ne.s32.totalorder %s78, %s94
      %p96 = scmp.eq.s32.totalorder %s28, 0
      %p97 = por %p95, %p96
      %s98 = ssub.s32 %s29, %s41
      %p99 = scmp.eq.s32.totalorder %s98, 0
      %s101 = sadd.s32 %s100, 1
      %s102 = scalar_select %p99, %s100, %s101
      %p105 = pneg %p99
      %p106 = scmp.eq.s32.totalorder %s22, 1
      %p107 = por %p105, %p106
      %p108 = scmp.ne.s32.totalorder %s100, %s103
      %p109 = scmp.eq.s32.totalorder %s22, 0
      %p110 = por %p108, %p109
      %p111 = scmp.ne.s32.totalorder %s100, %s103
      %p112 = scmp.eq.s32.totalorder %s27, 1
      %p113 = por %p111, %p112
      %p114 = scmp.ne.s32.totalorder %s103, %s104
      %p115 = scmp.eq.s32.totalorder %s27, 0
      %p116 = por %p114, %p115
      %p117 = scmp.ne.s32.totalorder %s103, %s104
      %p118 = scmp.eq.s32.totalorder %s28, 1
      %p119 = por %p117, %p118
      %p121 = scmp.ne.s32.totalorder %s104, %s120
      %p122 = scmp.eq.s32.totalorder %s28, 0
      %p123 = por %p121, %p122
      %s124 = ssub.s32 %s29, %s41
      %p125 = scmp.eq.s32.totalorder %s124, 0
      %s127 = sadd.s32 %s126, 1
      %s128 = scalar_select %p125, %s126, %s127
      %p131 = pneg %p125
      %p132 = scmp.eq.s32.totalorder %s22, 1
      %p133 = por %p131, %p132
      %p134 = scmp.ne.s32.totalorder %s126, %s129
      %p135 = scmp.eq.s32.totalorder %s22, 0
      %p136 = por %p134, %p135
      %p137 = scmp.ne.s32.totalorder %s126, %s129
      %p138 = scmp.eq.s32.totalorder %s27, 1
      %p139 = por %p137, %p138
      %p140 = scmp.ne.s32.totalorder %s129, %s130
      %p141 = scmp.eq.s32.totalorder %s27, 0
      %p142 = por %p140, %p141
      %p143 = scmp.ne.s32.totalorder %s129, %s130
      %p144 = scmp.eq.s32.totalorder %s28, 1
      %p145 = por %p143, %p144
      %p147 = scmp.ne.s32.totalorder %s130, %s146
      %p148 = scmp.eq.s32.totalorder %s28, 0
      %p149 = por %p147, %p148
      %p150 = scmp.le.s32.totalorder 1, %s22
      %p151 = scmp.lt.s32.totalorder %s22, 3
      %p152 = pnand %p150, %p151
      %p153 = pneg %p152
      // Predicated region
      $region9: #{tpu_custom_call.1} parent=5 // pred_check
        _
      $region10: #{tpu_custom_call.1} parent=5 // pred_check_branch
        %155 = sbr.rel (%p152) target = $region12
      $region11: #{tpu_custom_call.1} parent=5 // pred_region
        %s156 = ssub.s32 %s22, 1
      $region12: #{tpu_custom_call.1} parent=5 // pred_fallthru
        _
      %p157 = scmp.lt.s32.totalorder %s22, 2
      // Predicated region
      $region13: #{tpu_custom_call.1} parent=5 // pred_check
        %p158 = pneg %p157
      $region14: #{tpu_custom_call.1} parent=5 // pred_check_branch
        %160 = sbr.rel (%p158) target = $region16
      $region15: #{tpu_custom_call.1} parent=5 // pred_region
        // Predicated region
        $region17: #{tpu_custom_call.1} parent=15 // pred_check
          %p161 = pneg %p56
        $region18: #{tpu_custom_call.1} parent=15 // pred_check_branch
          %163 = sbr.rel (%p161) target = $region20
        $region19: #{tpu_custom_call.1} parent=15 // pred_region
          %s164 = sand.u32 %s46, 1
          %s165 = scalar_lea.sflag [#allocation3], %s164
          %s166 = sand.u32 %s46, 1
          %s167 = smul.addr %s166, 8
          %s168 = scalar_lea.vmem [#allocation2], %s167
          %s169 = sadd.s32 %s29, %s30
          %s170 = smul.u32 4, %s169
          %172 = vsyncadd %s165, 0
          %s173 = smul.addr %s170, 2
          %s174 = scalar_lea.hbm %s0, %s173
          %s176 = sshll.u32 %s174, 4
          %s177 = int_to_ptr.hbm [resolvable:$true] %s176
          %s178 = sshll.u32 %s168, 4
          %s179 = int_to_ptr.vmem [resolvable:$true] %s178
          %181 = dma.hbm_to_vmem [thread:$0]  %s177, 128, %s179, %s165
        $region20: #{tpu_custom_call.1} parent=15 // pred_fallthru
          _
        // Predicated region
        $region21: #{tpu_custom_call.1} parent=15 // pred_check
          %p182 = pneg %p84
        $region22: #{tpu_custom_call.1} parent=15 // pred_check_branch
          %184 = sbr.rel (%p182) target = $region24
        $region23: #{tpu_custom_call.1} parent=15 // pred_region
          %s185 = sand.u32 %s74, 1
          %s186 = scalar_lea.sflag [#allocation6], %s185
          %s187 = sand.u32 %s74, 1
          %s188 = smul.addr %s187, 8
          %s189 = scalar_lea.vmem [#allocation5], %s188
          %s190 = sadd.s32 %s29, %s30
          %s191 = smul.u32 4, %s190
          %193 = vsyncadd %s186, 0
          %s194 = smul.addr %s191, 2
          %s195 = scalar_lea.hbm %s1, %s194
          %s197 = sshll.u32 %s195, 4
          %s198 = int_to_ptr.hbm [resolvable:$true] %s197
          %s199 = sshll.u32 %s189, 4
          %s200 = int_to_ptr.vmem [resolvable:$true] %s199
          %202 = dma.hbm_to_vmem [thread:$0]  %s198, 128, %s200, %s186
        $region24: #{tpu_custom_call.1} parent=15 // pred_fallthru
          _
      $region16: #{tpu_custom_call.1} parent=5 // pred_fallthru
        _
      %p203 = scmp.le.s32.totalorder 1, %s22
      %p204 = scmp.lt.s32.totalorder %s22, 3
      %p205 = pnand %p203, %p204
      %p206 = pneg %p205
      // Predicated region
      $region25: #{tpu_custom_call.1} parent=5 // pred_check
        _
      $region26: #{tpu_custom_call.1} parent=5 // pred_check_branch
        %208 = sbr.rel (%p205) target = $region28
      $region27: #{tpu_custom_call.1} parent=5 // pred_region
        %s209 = ssub.s32 %s22, 1
        %s210 = sand.u32 %s49, 1
        %s211 = scalar_lea.sflag [#allocation3], %s210
        %s212 = sand.u32 %s49, 1
        %s213 = smul.addr %s212, 8
        %s214 = scalar_lea.vmem [#allocation2], %s213
        // Predicated region
        $region29: #{tpu_custom_call.1} parent=27 // pred_check
          %p215 = pneg %p62
        $region30: #{tpu_custom_call.1} parent=27 // pred_check_branch
          %217 = sbr.rel (%p215) target = $region32
        $region31: #{tpu_custom_call.1} parent=27 // pred_region
          %219 = dma.done %s211, 128
        $region32: #{tpu_custom_call.1} parent=27 // pred_fallthru
          _
        %s220 = sand.u32 %s77, 1
        %s221 = scalar_lea.sflag [#allocation6], %s220
        %s222 = sand.u32 %s77, 1
        %s223 = smul.addr %s222, 8
        %s224 = scalar_lea.vmem [#allocation5], %s223
        // Predicated region
        $region33: #{tpu_custom_call.1} parent=27 // pred_check
          %p225 = pneg %p90
        $region34: #{tpu_custom_call.1} parent=27 // pred_check_branch
          %227 = sbr.rel (%p225) target = $region36
        $region35: #{tpu_custom_call.1} parent=27 // pred_region
          %229 = dma.done %s221, 128
        $region36: #{tpu_custom_call.1} parent=27 // pred_fallthru
          _
        %s230 = sand.u32 %s49, 1
        %s231 = scalar_lea.sflag [#allocation3], %s230
        %s232 = sand.u32 %s49, 1
        %s233 = smul.addr %s232, 8
        %s234 = scalar_lea.vmem [#allocation2], %s233
        %p235 = pneg %p62
        %p236 = pneg %p59
        %s237 = sand.u32 %s77, 1
        %s238 = scalar_lea.sflag [#allocation6], %s237
        %s239 = sand.u32 %s77, 1
        %s240 = smul.addr %s239, 8
        %s241 = scalar_lea.vmem [#allocation5], %s240
        %p242 = pneg %p90
        %p243 = pneg %p87
        %p244 = pneg %p116
        %p245 = pneg %p113
        %s246 = sand.u32 %s103, 1
        %s247 = scalar_lea.sflag [#allocation4], %s246
        %s248 = sand.u32 %s103, 1
        %s249 = smul.addr %s248, 2
        %s250 = scalar_lea.vmem [#allocation7], %s249
        %p251 = pneg %p142
        %p252 = pneg %p139
        %s253 = sand.u32 %s129, 1
        %s254 = scalar_lea.sflag [#allocation9], %s253
        %s255 = sand.u32 %s129, 1
        %s256 = smul.addr %s255, 2
        %s257 = scalar_lea.vmem [#allocation8], %s256
        %s258 = sadd.s32 %s31, %s32
        %s259 = smul.u32 4, %s258
        %s260 = sadd.s32 %s31, %s32
        %s261 = smul.u32 4, %s260
        %p262 = scmp.eq.s32.totalorder %s32, 0
        // Predicated region
        $region37: #{tpu_custom_call.1} parent=27 // pred_check
          %p263 = pneg %p262
        $region38: #{tpu_custom_call.1} parent=27 // pred_check_branch
          %265 = sbr.rel (%p263) target = $region40
        $region39: #{tpu_custom_call.1} parent=27 // pred_region
          %vm266 = vcmask 9216
          %267 = vst.msk [vmem:[%s250] sm:$0x3] %vm266, 0.0
          %268 = vst.msk [vmem:[%s257] sm:$0x3] %vm266, 0.0
        $region40: #{tpu_custom_call.1} parent=27 // pred_fallthru
          _
        %v269 = vld [vmem:[%s214] sm:$0xff]
        %v270 = vld [vmem:[%s224] sm:$0xff]
        %v271 = vld [vmem:[%s250] sm:$0x3]
        %273 = vst [vmem:[#allocation1] ss:$4 sm:$0xff] %v269
        %v274 = vld.sshfl [vmem:[#allocation1] sm:$0xff pattern:$0x73625140]
        %v275 = vld.sshfl [vmem:[#allocation1 + $0x8] sm:$0xff pattern:$0x73625140]
        %v276 = vld.sshfl [vmem:[#allocation1 + $0x10] sm:$0xff pattern:$0x73625140]
        %v277 = vld.sshfl [vmem:[#allocation1 + $0x18] sm:$0xff pattern:$0x73625140]
        %282 = vst [vmem:[#allocation1] ss:$4 sm:$0xff] %v269
        %v283 = vld.sshfl [vmem:[#allocation1] sm:$0xff pattern:$0x73625140]
        %v284 = vld.sshfl [vmem:[#allocation1 + $0x8] sm:$0xff pattern:$0x73625140]
        %v285 = vld.sshfl [vmem:[#allocation1 + $0x10] sm:$0xff pattern:$0x73625140]
        %v286 = vld.sshfl [vmem:[#allocation1 + $0x18] sm:$0xff pattern:$0x73625140]
        %291 = vmatpush.xpose.msra.mxu0 0.0
        %292 = vmatpush.xpose.msra.mxu0 0.0
        %293 = vmatpush.xpose.msra.mxu0 0.0
        %294 = vmatpush.xpose.msra.mxu0 0.0
        %295 = vmatpush.xpose.msra.mxu0 0.0
        %296 = vmatpush.xpose.msra.mxu0 0.0
        %297 = vmatpush.xpose.msra.mxu0 0.0
        %298 = vmatpush.xpose.msra.mxu0 0.0
        %299 = vmatpush.xpose.msra.mxu0 0.0
        %300 = vmatpush.xpose.msra.mxu0 0.0
        %301 = vmatpush.xpose.msra.mxu0 0.0
        %302 = vmatpush.xpose.msra.mxu0 0.0
        %303 = vmatpush.xpose.msra.mxu0 0.0
        %304 = vmatpush.xpose.msra.mxu0 0.0
        %305 = vmatpush.xpose.msra.mxu0 0.0
        %306 = vmatpush.xpose.msra.mxu0 %v283
        %307 = vmatmul.f32.gmra.mxu0 %v274
        %v308 = vpop.f32.mrf.mxu0
        %v309 = vadd.f32 0.0, %v308
        %310 = vdwg.mxu0
        %311 = vmatpush.xpose.msra.mxu0 0.0
        %312 = vmatpush.xpose.msra.mxu0 0.0
        %313 = vmatpush.xpose.msra.mxu0 0.0
        %314 = vmatpush.xpose.msra.mxu0 0.0
        %315 = vmatpush.xpose.msra.mxu0 0.0
        %316 = vmatpush.xpose.msra.mxu0 0.0
        %317 = vmatpush.xpose.msra.mxu0 0.0
        %318 = vmatpush.xpose.msra.mxu0 0.0
        %319 = vmatpush.xpose.msra.mxu0 0.0
        %320 = vmatpush.xpose.msra.mxu0 0.0
        %321 = vmatpush.xpose.msra.mxu0 0.0
        %322 = vmatpush.xpose.msra.mxu0 0.0
        %323 = vmatpush.xpose.msra.mxu0 0.0
        %324 = vmatpush.xpose.msra.mxu0 0.0
        %325 = vmatpush.xpose.msra.mxu0 0.0
        %326 = vmatpush.xpose.msra.mxu0 %v284
        %327 = vmatmul.f32.gmra.mxu0 %v275
        %v328 = vpop.f32.mrf.mxu0
        %v329 = vadd.f32 %v309, %v328
        %330 = vdwg.mxu0
        %331 = vmatpush.xpose.msra.mxu0 0.0
        %332 = vmatpush.xpose.msra.mxu0 0.0
        %333 = vmatpush.xpose.msra.mxu0 0.0
        %334 = vmatpush.xpose.msra.mxu0 0.0
        %335 = vmatpush.xpose.msra.mxu0 0.0
        %336 = vmatpush.xpose.msra.mxu0 0.0
        %337 = vmatpush.xpose.msra.mxu0 0.0
        %338 = vmatpush.xpose.msra.mxu0 0.0
        %339 = vmatpush.xpose.msra.mxu0 0.0
        %340 = vmatpush.xpose.msra.mxu0 0.0
        %341 = vmatpush.xpose.msra.mxu0 0.0
        %342 = vmatpush.xpose.msra.mxu0 0.0
        %343 = vmatpush.xpose.msra.mxu0 0.0
        %344 = vmatpush.xpose.msra.mxu0 0.0
        %345 = vmatpush.xpose.msra.mxu0 0.0
        %346 = vmatpush.xpose.msra.mxu0 %v285
        %347 = vmatmul.f32.gmra.mxu0 %v276
        %v348 = vpop.f32.mrf.mxu0
        %v349 = vadd.f32 %v329, %v348
        %350 = vdwg.mxu0
        %351 = vmatpush.xpose.msra.mxu0 0.0
        %352 = vmatpush.xpose.msra.mxu0 0.0
        %353 = vmatpush.xpose.msra.mxu0 0.0
        %354 = vmatpush.xpose.msra.mxu0 0.0
        %355 = vmatpush.xpose.msra.mxu0 0.0
        %356 = vmatpush.xpose.msra.mxu0 0.0
        %357 = vmatpush.xpose.msra.mxu0 0.0
        %358 = vmatpush.xpose.msra.mxu0 0.0
        %359 = vmatpush.xpose.msra.mxu0 0.0
        %360 = vmatpush.xpose.msra.mxu0 0.0
        %361 = vmatpush.xpose.msra.mxu0 0.0
        %362 = vmatpush.xpose.msra.mxu0 0.0
        %363 = vmatpush.xpose.msra.mxu0 0.0
        %364 = vmatpush.xpose.msra.mxu0 0.0
        %365 = vmatpush.xpose.msra.mxu0 0.0
        %366 = vmatpush.xpose.msra.mxu0 %v286
        %367 = vmatmul.f32.gmra.mxu0 %v277
        %v368 = vpop.f32.mrf.mxu0
        %v369 = vadd.f32 %v349, %v368
        %370 = vdwg.mxu0
        %v371 = vadd.f32 %v271, %v369
        %vm372 = vcmask 9216
        %373 = vst.msk [vmem:[%s250] sm:$0x3] %vm372, %v371
        %v374 = vld [vmem:[%s257] sm:$0x3]
        %376 = vst [vmem:[#allocation1] ss:$4 sm:$0xff] %v270
        %v377 = vld.sshfl [vmem:[#allocation1] sm:$0xff pattern:$0x73625140]
        %v378 = vld.sshfl [vmem:[#allocation1 + $0x8] sm:$0xff pattern:$0x73625140]
        %v379 = vld.sshfl [vmem:[#allocation1 + $0x10] sm:$0xff pattern:$0x73625140]
        %v380 = vld.sshfl [vmem:[#allocation1 + $0x18] sm:$0xff pattern:$0x73625140]
        %385 = vst [vmem:[#allocation1] ss:$4 sm:$0xff] %v270
        %v386 = vld.sshfl [vmem:[#allocation1] sm:$0xff pattern:$0x73625140]
        %v387 = vld.sshfl [vmem:[#allocation1 + $0x8] sm:$0xff pattern:$0x73625140]
        %v388 = vld.sshfl [vmem:[#allocation1 + $0x10] sm:$0xff pattern:$0x73625140]
        %v389 = vld.sshfl [vmem:[#allocation1 + $0x18] sm:$0xff pattern:$0x73625140]
        %394 = vmatpush.xpose.msra.mxu0 0.0
        %395 = vmatpush.xpose.msra.mxu0 0.0
        %396 = vmatpush.xpose.msra.mxu0 0.0
        %397 = vmatpush.xpose.msra.mxu0 0.0
        %398 = vmatpush.xpose.msra.mxu0 0.0
        %399 = vmatpush.xpose.msra.mxu0 0.0
        %400 = vmatpush.xpose.msra.mxu0 0.0
        %401 = vmatpush.xpose.msra.mxu0 0.0
        %402 = vmatpush.xpose.msra.mxu0 0.0
        %403 = vmatpush.xpose.msra.mxu0 0.0
        %404 = vmatpush.xpose.msra.mxu0 0.0
        %405 = vmatpush.xpose.msra.mxu0 0.0
        %406 = vmatpush.xpose.msra.mxu0 0.0
        %407 = vmatpush.xpose.msra.mxu0 0.0
        %408 = vmatpush.xpose.msra.mxu0 0.0
        %409 = vmatpush.xpose.msra.mxu0 %v386
        %410 = vmatmul.f32.gmra.mxu0 %v377
        %v411 = vpop.f32.mrf.mxu0
        %v412 = vadd.f32 0.0, %v411
        %413 = vdwg.mxu0
        %414 = vmatpush.xpose.msra.mxu0 0.0
        %415 = vmatpush.xpose.msra.mxu0 0.0
        %416 = vmatpush.xpose.msra.mxu0 0.0
        %417 = vmatpush.xpose.msra.mxu0 0.0
        %418 = vmatpush.xpose.msra.mxu0 0.0
        %419 = vmatpush.xpose.msra.mxu0 0.0
        %420 = vmatpush.xpose.msra.mxu0 0.0
        %421 = vmatpush.xpose.msra.mxu0 0.0
        %422 = vmatpush.xpose.msra.mxu0 0.0
        %423 = vmatpush.xpose.msra.mxu0 0.0
        %424 = vmatpush.xpose.msra.mxu0 0.0
        %425 = vmatpush.xpose.msra.mxu0 0.0
        %426 = vmatpush.xpose.msra.mxu0 0.0
        %427 = vmatpush.xpose.msra.mxu0 0.0
        %428 = vmatpush.xpose.msra.mxu0 0.0
        %429 = vmatpush.xpose.msra.mxu0 %v387
        %430 = vmatmul.f32.gmra.mxu0 %v378
        %v431 = vpop.f32.mrf.mxu0
        %v432 = vadd.f32 %v412, %v431
        %433 = vdwg.mxu0
        %434 = vmatpush.xpose.msra.mxu0 0.0
        %435 = vmatpush.xpose.msra.mxu0 0.0
        %436 = vmatpush.xpose.msra.mxu0 0.0
        %437 = vmatpush.xpose.msra.mxu0 0.0
        %438 = vmatpush.xpose.msra.mxu0 0.0
        %439 = vmatpush.xpose.msra.mxu0 0.0
        %440 = vmatpush.xpose.msra.mxu0 0.0
        %441 = vmatpush.xpose.msra.mxu0 0.0
        %442 = vmatpush.xpose.msra.mxu0 0.0
        %443 = vmatpush.xpose.msra.mxu0 0.0
        %444 = vmatpush.xpose.msra.mxu0 0.0
        %445 = vmatpush.xpose.msra.mxu0 0.0
        %446 = vmatpush.xpose.msra.mxu0 0.0
        %447 = vmatpush.xpose.msra.mxu0 0.0
        %448 = vmatpush.xpose.msra.mxu0 0.0
        %449 = vmatpush.xpose.msra.mxu0 %v388
        %450 = vmatmul.f32.gmra.mxu0 %v379
        %v451 = vpop.f32.mrf.mxu0
        %v452 = vadd.f32 %v432, %v451
        %453 = vdwg.mxu0
        %454 = vmatpush.xpose.msra.mxu0 0.0
        %455 = vmatpush.xpose.msra.mxu0 0.0
        %456 = vmatpush.xpose.msra.mxu0 0.0
        %457 = vmatpush.xpose.msra.mxu0 0.0
        %458 = vmatpush.xpose.msra.mxu0 0.0
        %459 = vmatpush.xpose.msra.mxu0 0.0
        %460 = vmatpush.xpose.msra.mxu0 0.0
        %461 = vmatpush.xpose.msra.mxu0 0.0
        %462 = vmatpush.xpose.msra.mxu0 0.0
        %463 = vmatpush.xpose.msra.mxu0 0.0
        %464 = vmatpush.xpose.msra.mxu0 0.0
        %465 = vmatpush.xpose.msra.mxu0 0.0
        %466 = vmatpush.xpose.msra.mxu0 0.0
        %467 = vmatpush.xpose.msra.mxu0 0.0
        %468 = vmatpush.xpose.msra.mxu0 0.0
        %469 = vmatpush.xpose.msra.mxu0 %v389
        %470 = vmatmul.f32.gmra.mxu0 %v380
        %v471 = vpop.f32.mrf.mxu0
        %v472 = vadd.f32 %v452, %v471
        %473 = vdwg.mxu0
        %v474 = vadd.f32 %v374, %v472
        %475 = vst.msk [vmem:[%s257] sm:$0x3] %vm372, %v474
        %s476 = sand.u32 %s103, 1
        %s477 = scalar_lea.sflag [#allocation4], %s476
        %s478 = sand.u32 %s103, 1
        %s479 = smul.addr %s478, 2
        %s480 = scalar_lea.vmem [#allocation7], %s479
        %s481 = sand.u32 %s129, 1
        %s482 = scalar_lea.sflag [#allocation9], %s481
        %s483 = sand.u32 %s129, 1
        %s484 = smul.addr %s483, 2
        %s485 = scalar_lea.vmem [#allocation8], %s484
        // Predicated region
        $region41: #{tpu_custom_call.1} parent=27 // pred_check
          %p486 = pneg %p113
        $region42: #{tpu_custom_call.1} parent=27 // pred_check_branch
          %488 = sbr.rel (%p486) target = $region44
        $region43: #{tpu_custom_call.1} parent=27 // pred_region
          %490 = vsyncadd %s477, 0
          %s491 = smul.addr %s31, 2
          %s492 = scalar_lea.hbm %s2, %s491
          %s494 = sshll.u32 %s480, 4
          %s495 = int_to_ptr.vmem [resolvable:$true] %s494
          %s496 = sshll.u32 %s492, 4
          %s497 = int_to_ptr.hbm [resolvable:$true] %s496
          %499 = dma.vmem_to_hbm [thread:$0]  %s495, 32, %s497, %s477
        $region44: #{tpu_custom_call.1} parent=27 // pred_fallthru
          _
        // Predicated region
        $region45: #{tpu_custom_call.1} parent=27 // pred_check
          %p500 = pneg %p139
        $region46: #{tpu_custom_call.1} parent=27 // pred_check_branch
          %502 = sbr.rel (%p500) target = $region48
        $region47: #{tpu_custom_call.1} parent=27 // pred_region
          %504 = vsyncadd %s482, 0
          %s505 = smul.addr %s31, 2
          %s506 = scalar_lea.hbm %s3, %s505
          %s508 = sshll.u32 %s485, 4
          %s509 = int_to_ptr.vmem [resolvable:$true] %s508
          %s510 = sshll.u32 %s506, 4
          %s511 = int_to_ptr.hbm [resolvable:$true] %s510
          %513 = dma.vmem_to_hbm [thread:$0]  %s509, 32, %s511, %s482
        $region48: #{tpu_custom_call.1} parent=27 // pred_fallthru
          _
      $region28: #{tpu_custom_call.1} parent=5 // pred_fallthru
        _
      %p514 = scmp.le.s32.totalorder 2, %s22
      // Predicated region
      $region49: #{tpu_custom_call.1} parent=5 // pred_check
        %p515 = pneg %p514
      $region50: #{tpu_custom_call.1} parent=5 // pred_check_branch
        %517 = sbr.rel (%p515) target = $region52
      $region51: #{tpu_custom_call.1} parent=5 // pred_region
        %s518 = ssub.s32 %s22, 2
        // Predicated region
        $region53: #{tpu_custom_call.1} parent=51 // pred_check
          %p519 = pneg %p119
        $region54: #{tpu_custom_call.1} parent=51 // pred_check_branch
          %521 = sbr.rel (%p519) target = $region56
        $region55: #{tpu_custom_call.1} parent=51 // pred_region
          %s522 = sand.u32 %s104, 1
          %s523 = scalar_lea.sflag [#allocation4], %s522
          %s524 = sand.u32 %s104, 1
          %s525 = smul.addr %s524, 2
          %s526 = scalar_lea.vmem [#allocation7], %s525
          %528 = dma.done %s523, 32
        $region56: #{tpu_custom_call.1} parent=51 // pred_fallthru
          _
        // Predicated region
        $region57: #{tpu_custom_call.1} parent=51 // pred_check
          %p529 = pneg %p145
        $region58: #{tpu_custom_call.1} parent=51 // pred_check_branch
          %531 = sbr.rel (%p529) target = $region60
        $region59: #{tpu_custom_call.1} parent=51 // pred_region
          %s532 = sand.u32 %s130, 1
          %s533 = scalar_lea.sflag [#allocation9], %s532
          %s534 = sand.u32 %s130, 1
          %s535 = smul.addr %s534, 2
          %s536 = scalar_lea.vmem [#allocation8], %s535
          %538 = dma.done %s533, 32
        $region60: #{tpu_custom_call.1} parent=51 // pred_fallthru
          _
      $region52: #{tpu_custom_call.1} parent=5 // pred_fallthru
        _
    $region6: #{tpu_custom_call.1} parent=1 // loop_footer
      %s26 = sadd.s32 1, %s22
    $region7: #{tpu_custom_call.1} parent=1 // loop_footer_branch
      %21 = sbr.rel target = $region3
    $region8: #{tpu_custom_call.1} parent=1 // loop_exit
      _
    %539 = vsyncpa [#allocation3], 1
    %s540 = scalar_lea.sflag [#allocation3], 1
    %541 = vsyncpa %s540, 1
    %542 = vsyncpa [#allocation6], 1
    %s543 = scalar_lea.sflag [#allocation6], 1
    %544 = vsyncpa %s543, 1
    %545 = vsyncpa [#allocation4], 1
    %s546 = scalar_lea.sflag [#allocation4], 1
    %547 = vsyncpa %s546, 1
    %548 = vsyncpa [#allocation9], 1
    %s549 = scalar_lea.sflag [#allocation9], 1
    %550 = vsyncpa %s549, 1

</llo_original>
